<compile_context>
chip_gen: v5e
topology: v5e:2x2
jax: 0.10.0
libtpu: 0.0.40
codegen_flags: <defaults>
</compile_context>

<pallas_src>
import jax
import jax.numpy as jnp
from jax.experimental import pallas as pl
from jax.experimental.pallas import tpu as pltpu

IN_FEATURES = 2
HIDDEN = 50
N_CLASSES = 2
OUT_FEATURES = N_CLASSES + 1  # 3

MAX_TB = 8192           # max batch-tile (lanes) per grid step
SINGLE_TILE_MAX = 1024  # below this, one full-extent tile (no pad / alignment needed)


def _round_up(n, m):
    return ((n + m - 1) // m) * m


def mlp_kernel(x_ref, w1_ref, b1_ref, w2_ref, b2_ref, out_ref):
    # Dropout(0.2) -> identity (eval mode).
    x = x_ref[...]        # [2, tb]   feature-major: lanes = batch
    w1 = w1_ref[...]      # [50, 2]   PyTorch Linear layout [out, in]

    # Linear(2, 50): K=2 would waste >98% of the MXU, so do two VPU broadcast
    # FMAs.  The x rows broadcast 1 -> 50 along the cheap sublane path; the
    # weight columns broadcast along lanes (tiny, grid-step cost only).
    h = (w1[:, 0:1] * x[0:1, :]
         + w1[:, 1:2] * x[1:2, :]
         + b1_ref[...])                                    # [50, tb]

    # Dropout(0.2) -> identity (eval mode), then ReLU.
    h = jnp.maximum(h, 0.0)

    # Linear(50, 3) on the MXU: [3, 50] @ [50, tb] -> [3, tb].
    out = jnp.dot(w2_ref[...], h, preferred_element_type=jnp.float32)
    out_ref[...] = (out + b2_ref[...]).astype(out_ref.dtype)


def nn_forward(x, w1, b1, w2, b2):
    """x: [B, 2] f32.  Params in PyTorch Linear layout:
       w1 [50, 2], b1 [50], w2 [3, 50], b2 [3].
       Returns (mean [B, 2], logvar [B, 1])."""
    B = x.shape[0]

    # Feature-major dataflow: lane axis carries the batch.
    xt = x.T                                  # [2, B]
    b1c = b1.reshape(HIDDEN, 1)
    b2c = b2.reshape(OUT_FEATURES, 1)

    # Tile selection: small B -> single full-extent tile (block dim == array
    # dim, so no 128-alignment or padding); large B -> 128-aligned tiles with
    # >= ~4 grid steps so both v7x TensorCores get work.
    if B <= SINGLE_TILE_MAX:
        tb, num_tiles = B, 1
    else:
        tb = min(MAX_TB, _round_up(pl.cdiv(B, 4), 128))
        num_tiles = pl.cdiv(B, tb)

    b_padded = num_tiles * tb
    if b_padded != B:
        # Only triggers for a ragged last tile.
        xt = jnp.pad(xt, ((0, 0), (0, b_padded - B)))

    param_spec = lambda shape: pl.BlockSpec(shape, lambda i: (0, 0))

    out = pl.pallas_call(
        mlp_kernel,
        out_shape=jax.ShapeDtypeStruct((OUT_FEATURES, b_padded), jnp.float32),
        grid=(num_tiles,),
        in_specs=[
            pl.BlockSpec((IN_FEATURES, tb), lambda i: (0, i)),  # x.T, batch on lanes
            param_spec(w1.shape),    # tiny params stay VMEM-resident across steps
            param_spec(b1c.shape),
            param_spec(w2.shape),
            param_spec(b2c.shape),
        ],
        out_specs=pl.BlockSpec((OUT_FEATURES, tb), lambda i: (0, i)),
        compiler_params=pltpu.CompilerParams(
            dimension_semantics=("parallel",),
        ),
    )(xt, w1, b1c, w2, b2c)

    out = out[:, :B]
    mean = out[:N_CLASSES, :].T      # [B, 2]
    logvar = out[N_CLASSES:, :].T    # [B, 1]
    return mean, logvar


def init_params(key):
    # PyTorch default Linear init: uniform(-1/sqrt(fan_in), +1/sqrt(fan_in)),
    # stored in PyTorch layout (weight [out, in], bias [out]).
    k1, k2, k3, k4 = jax.random.split(key, 4)
    bound1 = 1.0 / jnp.sqrt(IN_FEATURES)
    bound2 = 1.0 / jnp.sqrt(HIDDEN)
    w1 = jax.random.uniform(k1, (HIDDEN, IN_FEATURES), jnp.float32, -bound1, bound1)
    b1 = jax.random.uniform(k2, (HIDDEN,), jnp.float32, -bound1, bound1)
    w2 = jax.random.uniform(k3, (OUT_FEATURES, HIDDEN), jnp.float32, -bound2, bound2)
    b2 = jax.random.uniform(k4, (OUT_FEATURES,), jnp.float32, -bound2, bound2)
    return w1, b1, w2, b2


def _reference(x, w1, b1, w2, b2):
    h = jnp.maximum(x @ w1.T + b1, 0.0)
    return h @ w2.T + b2


def _check(x, params):
    mean, logvar = nn_forward(x, *params)
    jax.block_until_ready((mean, logvar))
    ref = _reference(x, *params)
    B = x.shape[0]
    assert mean.shape == (B, N_CLASSES) and logvar.shape == (B, 1)
    assert jnp.allclose(mean, ref[:, :N_CLASSES], atol=1e-5), "mean mismatch"
    assert jnp.allclose(logvar, ref[:, N_CLASSES:], atol=1e-5), "logvar mismatch"


if __name__ == "__main__":
    key = jax.random.PRNGKey(0)
    kx1, kx2, kx3, kx4, kp = jax.random.split(key, 5)
    params = init_params(kp)

    # Small batch (single full-extent tile).
    _check(jax.random.normal(kx1, (8, IN_FEATURES), jnp.float32), params)

    # Non-multiple-of-128 small batch (still single tile, no padding).
    _check(jax.random.normal(kx2, (130, IN_FEATURES), jnp.float32), params)

    # Multi-tile grid, tile divides batch exactly (no pad path).
    _check(jax.random.normal(kx3, (4096, IN_FEATURES), jnp.float32), params)

    # Multi-tile grid with ragged last tile (exercises the pad path).
    _check(jax.random.normal(kx4, (2500, IN_FEATURES), jnp.float32), params)

    print("KERNEL_OK")
</pallas_src>

<mosaic_0001>
module attributes {stable_mosaic.version = 11 : i64} {
  func.func @mlp_kernel(%arg0: i32, %arg1: memref<2x8xf32, #tpu.memory_space<vmem>>, %arg2: memref<50x2xf32, #tpu.memory_space<vmem>>, %arg3: memref<50x1xf32, #tpu.memory_space<vmem>>, %arg4: memref<3x50xf32, #tpu.memory_space<vmem>>, %arg5: memref<3x1xf32, #tpu.memory_space<vmem>>, %arg6: memref<3x8xf32, #tpu.memory_space<vmem>>) attributes {dimension_semantics = [#tpu.dimension_semantics<parallel>], iteration_bounds = array<i64: 1>, scalar_prefetch = 0 : i64, scratch_operands = 0 : i64, tpu.core_type = #tpu.core_type<tc>, window_params = [{transform_indices = @transform_0, window_bounds = array<i64: 2, 8>}, {pipeline_mode = #tpu.pipeline_mode<synchronous>, transform_indices = @transform_1, window_bounds = array<i64: 50, 2>}, {pipeline_mode = #tpu.pipeline_mode<synchronous>, transform_indices = @transform_2, window_bounds = array<i64: 50, 1>}, {pipeline_mode = #tpu.pipeline_mode<synchronous>, transform_indices = @transform_3, window_bounds = array<i64: 3, 50>}, {pipeline_mode = #tpu.pipeline_mode<synchronous>, transform_indices = @transform_4, window_bounds = array<i64: 3, 1>}, {transform_indices = @transform_5, window_bounds = array<i64: 3, 8>}]} {
    %c0 = arith.constant 0 : index
    %c0_0 = arith.constant 0 : index
    %0 = vector.load %arg1[%c0, %c0_0] : memref<2x8xf32, #tpu.memory_space<vmem>>, vector<2x8xf32>
    %c0_1 = arith.constant 0 : index
    %c0_2 = arith.constant 0 : index
    %1 = vector.load %arg2[%c0_1, %c0_2] : memref<50x2xf32, #tpu.memory_space<vmem>>, vector<50x2xf32>
    %2 = vector.extract_strided_slice %1 {offsets = [0, 0], sizes = [50, 1], strides = [1, 1]} : vector<50x2xf32> to vector<50x1xf32>
    %3 = vector.extract_strided_slice %0 {offsets = [0, 0], sizes = [1, 8], strides = [1, 1]} : vector<2x8xf32> to vector<1x8xf32>
    %4 = vector.broadcast %2 : vector<50x1xf32> to vector<50x8xf32>
    %5 = vector.broadcast %3 : vector<1x8xf32> to vector<50x8xf32>
    %6 = arith.mulf %4, %5 : vector<50x8xf32>
    %7 = vector.extract_strided_slice %1 {offsets = [0, 1], sizes = [50, 1], strides = [1, 1]} : vector<50x2xf32> to vector<50x1xf32>
    %8 = vector.extract_strided_slice %0 {offsets = [1, 0], sizes = [1, 8], strides = [1, 1]} : vector<2x8xf32> to vector<1x8xf32>
    %9 = vector.broadcast %7 : vector<50x1xf32> to vector<50x8xf32>
    %10 = vector.broadcast %8 : vector<1x8xf32> to vector<50x8xf32>
    %11 = arith.mulf %9, %10 : vector<50x8xf32>
    %12 = arith.addf %6, %11 : vector<50x8xf32>
    %c0_3 = arith.constant 0 : index
    %c0_4 = arith.constant 0 : index
    %13 = vector.load %arg3[%c0_3, %c0_4] : memref<50x1xf32, #tpu.memory_space<vmem>>, vector<50x1xf32>
    %14 = vector.broadcast %13 : vector<50x1xf32> to vector<50x8xf32>
    %15 = arith.addf %12, %14 : vector<50x8xf32>
    %cst = arith.constant 0.000000e+00 : f32
    %16 = vector.broadcast %cst : f32 to vector<50x8xf32>
    %17 = arith.maximumf %15, %16 : vector<50x8xf32>
    %c0_5 = arith.constant 0 : index
    %c0_6 = arith.constant 0 : index
    %18 = vector.load %arg4[%c0_5, %c0_6] : memref<3x50xf32, #tpu.memory_space<vmem>>, vector<3x50xf32>
    %cst_7 = arith.constant dense<0.000000e+00> : vector<3x8xf32>
    %19 = tpu.matmul %18, %17, %cst_7 {dimension_numbers = #tpu.dot_dimension_numbers<[1], [0], [0], [1], [0, 0, 1, 1], [], []>} : vector<3x50xf32>, vector<50x8xf32>, vector<3x8xf32> -> vector<3x8xf32>
    %c0_8 = arith.constant 0 : index
    %c0_9 = arith.constant 0 : index
    %20 = vector.load %arg5[%c0_8, %c0_9] : memref<3x1xf32, #tpu.memory_space<vmem>>, vector<3x1xf32>
    %21 = vector.broadcast %20 : vector<3x1xf32> to vector<3x8xf32>
    %22 = arith.addf %19, %21 : vector<3x8xf32>
    %c0_10 = arith.constant 0 : index
    %c0_11 = arith.constant 0 : index
    %23 = vector.load %arg6[%c0_10, %c0_11] : memref<3x8xf32, #tpu.memory_space<vmem>>, vector<3x8xf32>
    tpu.vector_store %arg6[%c0_10, %c0_11], %22 {strides = array<i32>} : memref<3x8xf32, #tpu.memory_space<vmem>>, vector<3x8xf32>,
    return
  }
  func.func @transform_0(%arg0: i32) -> (i32, i32) {
    %c0_i32 = arith.constant 0 : i32
    %c0_i32_0 = arith.constant 0 : i32
    return %c0_i32, %arg0 : i32, i32
  }
  func.func @transform_1(%arg0: i32) -> (i32, i32) {
    %c0_i32 = arith.constant 0 : i32
    %c0_i32_0 = arith.constant 0 : i32
    %c0_i32_1 = arith.constant 0 : i32
    return %c0_i32, %c0_i32_0 : i32, i32
  }
  func.func @transform_2(%arg0: i32) -> (i32, i32) {
    %c0_i32 = arith.constant 0 : i32
    %c0_i32_0 = arith.constant 0 : i32
    %c0_i32_1 = arith.constant 0 : i32
    return %c0_i32, %c0_i32_0 : i32, i32
  }
  func.func @transform_3(%arg0: i32) -> (i32, i32) {
    %c0_i32 = arith.constant 0 : i32
    %c0_i32_0 = arith.constant 0 : i32
    %c0_i32_1 = arith.constant 0 : i32
    return %c0_i32, %c0_i32_0 : i32, i32
  }
  func.func @transform_4(%arg0: i32) -> (i32, i32) {
    %c0_i32 = arith.constant 0 : i32
    %c0_i32_0 = arith.constant 0 : i32
    %c0_i32_1 = arith.constant 0 : i32
    return %c0_i32, %c0_i32_0 : i32, i32
  }
  func.func @transform_5(%arg0: i32) -> (i32, i32) {
    %c0_i32 = arith.constant 0 : i32
    %c0_i32_0 = arith.constant 0 : i32
    return %c0_i32, %arg0 : i32, i32
  }
}

</mosaic_0001>

<llo_original>
// kernel: tpu_custom_call.1
$region0: #{tpu_custom_call.1}
  #allocation0 [shape = 'u32[]', space=smem, size = 0x4, offset = 0x4, fixed_abs, tag = 'smem constant byte address 0x4 - core index']
  #allocation1 [shape = 'u32[72,128]{1,0:T(1,128)}', space=vmem, size = 0x9000, scoped, tag = 'internal scratch']
  %s0 = inlined_call_operand.vmem [shape: f32[2,8], index: 0, kind: input, shape index: {}]
  %s1 = inlined_call_operand.vmem [shape: f32[50,2], index: 1, kind: input, shape index: {}]
  %s2 = inlined_call_operand.vmem [shape: f32[50,1], index: 2, kind: input, shape index: {}]
  %s3 = inlined_call_operand.vmem [shape: f32[3,50], index: 3, kind: input, shape index: {}]
  %s4 = inlined_call_operand.vmem [shape: f32[3,1], index: 4, kind: input, shape index: {}]
  %s5 = inlined_call_operand.hbm [shape: f32[3,8], index: 5, kind: output, shape index: {}]
  %s6 = sld [smem:[#allocation0]]
  $region30: #{tpu_custom_call.1} parent=0
    _
  %s8 = ssub.s32 1, %s6
  %s9 = scalar_select 0, %s8, %s6
  $region1: #{tpu_custom_call.1} parent=0
    #allocation2 [shape = 'u8[2048]{0}', space=vmem, size = 0x800, scoped, tag = 'output window, operand 0, single buffered']
    #allocation3 [shape = 's32[1]{0}', space=sflag, size = 0x4, scoped, tag = 'scoped memory for tpu_custom_call.1']
    %10 = vsyncpa [#allocation3], 0
    // Predicated region
    $region2: #{tpu_custom_call.1} parent=1 // pred_check
      _
    $region3: #{tpu_custom_call.1} parent=1 // pred_check_branch
      %12 = sbr.rel (0) target = $region5
    $region4: #{tpu_custom_call.1} parent=1 // pred_region
      _
    $region5: #{tpu_custom_call.1} parent=1 // pred_fallthru
      _
    // Predicated region
    $region6: #{tpu_custom_call.1} parent=1 // pred_check
      _
    $region7: #{tpu_custom_call.1} parent=1 // pred_check_branch
      %14 = sbr.rel (0) target = $region9
    $region8: #{tpu_custom_call.1} parent=1 // pred_region
      _
    $region9: #{tpu_custom_call.1} parent=1 // pred_fallthru
      _
    // Predicated region
    $region10: #{tpu_custom_call.1} parent=1 // pred_check
      _
    $region11: #{tpu_custom_call.1} parent=1 // pred_check_branch
      %16 = sbr.rel (0) target = $region13
    $region12: #{tpu_custom_call.1} parent=1 // pred_region
      _
    $region13: #{tpu_custom_call.1} parent=1 // pred_fallthru
      _
    // Predicated region
    $region14: #{tpu_custom_call.1} parent=1 // pred_check
      _
    $region15: #{tpu_custom_call.1} parent=1 // pred_check_branch
      %18 = sbr.rel (0) target = $region17
    $region16: #{tpu_custom_call.1} parent=1 // pred_region
      _
    $region17: #{tpu_custom_call.1} parent=1 // pred_fallthru
      _
    // Predicated region
    $region18: #{tpu_custom_call.1} parent=1 // pred_check
      _
    $region19: #{tpu_custom_call.1} parent=1 // pred_check_branch
      %20 = sbr.rel (0) target = $region21
    $region20: #{tpu_custom_call.1} parent=1 // pred_region
      _
    $region21: #{tpu_custom_call.1} parent=1 // pred_fallthru
      _
    %v21 = vld [vmem:[%s0] sm:$0x3]
    %v22 = vld [vmem:[%s1] sm:$0xff]
    %v23 = vld [vmem:[%s1 + $0x8] sm:$0xff]
    %v24 = vld [vmem:[%s1 + $0x10] sm:$0xff]
    %v25 = vld [vmem:[%s1 + $0x18] sm:$0xff]
    %v26 = vld [vmem:[%s1 + $0x20] sm:$0xff]
    %v27 = vld [vmem:[%s1 + $0x28] sm:$0xff]
    %v28 = vld [vmem:[%s1 + $0x30] sm:$0x3]
    %30 = vset.pattern.permute.xlu0 0
    %31 = vperm.xlu0 %30, %v22
    %v32 = vpop.permute.xlu0 %31
    %35 = vset.pattern.permute.xlu0 0
    %36 = vperm.xlu0 %35, %v23
    %v37 = vpop.permute.xlu0 %36
    %40 = vset.pattern.permute.xlu0 0
    %41 = vperm.xlu0 %40, %v24
    %v42 = vpop.permute.xlu0 %41
    %45 = vset.pattern.permute.xlu0 0
    %46 = vperm.xlu0 %45, %v25
    %v47 = vpop.permute.xlu0 %46
    %50 = vset.pattern.permute.xlu0 0
    %51 = vperm.xlu0 %50, %v26
    %v52 = vpop.permute.xlu0 %51
    %55 = vset.pattern.permute.xlu0 0
    %56 = vperm.xlu0 %55, %v27
    %v57 = vpop.permute.xlu0 %56
    %60 = vset.pattern.permute.xlu0 0
    %61 = vperm.xlu0 %60, %v28
    %v62 = vpop.permute.xlu0 %61
    %v64 = vperm.slane %v21, 0
    %v65 = vmul.f32 %v32, %v64
    %v66 = vmul.f32 %v37, %v64
    %v67 = vmul.f32 %v42, %v64
    %v68 = vmul.f32 %v47, %v64
    %v69 = vmul.f32 %v52, %v64
    %v70 = vmul.f32 %v57, %v64
    %v71 = vmul.f32 %v62, %v64
    %72 = vset.pattern.permute.xlu0 1
    %73 = vperm.xlu0 %72, %v22
    %v74 = vpop.permute.xlu0 %73
    %76 = vset.pattern.permute.xlu0 1
    %77 = vperm.xlu0 %76, %v23
    %v78 = vpop.permute.xlu0 %77
    %80 = vset.pattern.permute.xlu0 1
    %81 = vperm.xlu0 %80, %v24
    %v82 = vpop.permute.xlu0 %81
    %84 = vset.pattern.permute.xlu0 1
    %85 = vperm.xlu0 %84, %v25
    %v86 = vpop.permute.xlu0 %85
    %88 = vset.pattern.permute.xlu0 1
    %89 = vperm.xlu0 %88, %v26
    %v90 = vpop.permute.xlu0 %89
    %92 = vset.pattern.permute.xlu0 1
    %93 = vperm.xlu0 %92, %v27
    %v94 = vpop.permute.xlu0 %93
    %96 = vset.pattern.permute.xlu0 1
    %97 = vperm.xlu0 %96, %v28
    %v98 = vpop.permute.xlu0 %97
    %v100 = vperm.slane %v21, 1
    %v101 = vmul.f32 %v74, %v100
    %v102 = vmul.f32 %v78, %v100
    %v103 = vmul.f32 %v82, %v100
    %v104 = vmul.f32 %v86, %v100
    %v105 = vmul.f32 %v90, %v100
    %v106 = vmul.f32 %v94, %v100
    %v107 = vmul.f32 %v98, %v100
    %v108 = vadd.f32 %v65, %v101
    %v109 = vadd.f32 %v66, %v102
    %v110 = vadd.f32 %v67, %v103
    %v111 = vadd.f32 %v68, %v104
    %v112 = vadd.f32 %v69, %v105
    %v113 = vadd.f32 %v70, %v106
    %v114 = vadd.f32 %v71, %v107
    %v115 = vld [vmem:[%s2] sm:$0xff]
    %v116 = vld [vmem:[%s2 + $0x8] sm:$0xff]
    %v117 = vld [vmem:[%s2 + $0x10] sm:$0xff]
    %v118 = vld [vmem:[%s2 + $0x18] sm:$0xff]
    %v119 = vld [vmem:[%s2 + $0x20] sm:$0xff]
    %v120 = vld [vmem:[%s2 + $0x28] sm:$0xff]
    %v121 = vld [vmem:[%s2 + $0x30] sm:$0x3]
    %123 = vset.pattern.permute.xlu0 0
    %124 = vperm.xlu0 %123, %v115
    %v125 = vpop.permute.xlu0 %124
    %128 = vset.pattern.permute.xlu0 0
    %129 = vperm.xlu0 %128, %v116
    %v130 = vpop.permute.xlu0 %129
    %133 = vset.pattern.permute.xlu0 0
    %134 = vperm.xlu0 %133, %v117
    %v135 = vpop.permute.xlu0 %134
    %138 = vset.pattern.permute.xlu0 0
    %139 = vperm.xlu0 %138, %v118
    %v140 = vpop.permute.xlu0 %139
    %143 = vset.pattern.permute.xlu0 0
    %144 = vperm.xlu0 %143, %v119
    %v145 = vpop.permute.xlu0 %144
    %148 = vset.pattern.permute.xlu0 0
    %149 = vperm.xlu0 %148, %v120
    %v150 = vpop.permute.xlu0 %149
    %153 = vset.pattern.permute.xlu0 0
    %154 = vperm.xlu0 %153, %v121
    %v155 = vpop.permute.xlu0 %154
    %v157 = vadd.f32 %v108, %v125
    %v158 = vadd.f32 %v109, %v130
    %v159 = vadd.f32 %v110, %v135
    %v160 = vadd.f32 %v111, %v140
    %v161 = vadd.f32 %v112, %v145
    %v162 = vadd.f32 %v113, %v150
    %v163 = vadd.f32 %v114, %v155
    %v164 = vmax.f32 %v157, 0.0
    %v165 = vmax.f32 %v158, 0.0
    %v166 = vmax.f32 %v159, 0.0
    %v167 = vmax.f32 %v160, 0.0
    %v168 = vmax.f32 %v161, 0.0
    %v169 = vmax.f32 %v162, 0.0
    %v170 = vmax.f32 %v163, 0.0
    %v171 = vld [vmem:[%s3] sm:$0x7]
    %v172 = vld [vmem:[%s4] sm:$0x7]
    %174 = vset.pattern.permute.xlu0 0
    %175 = vperm.xlu0 %174, %v172
    %v176 = vpop.permute.xlu0 %175
    %vm178 = vcmask 408576
    %v180 = vsel %vm178, %v171, 0
    %vm182 = vcmask 1041408
    %v184 = vsel %vm182, %v170, 0
    %186 = vmatpush.msra.mxu0 0.0
    %187 = vmatpush.msra.mxu0 0.0
    %188 = vmatpush.msra.mxu0 0.0
    %189 = vmatpush.msra.mxu0 0.0
    %190 = vmatpush.msra.mxu0 0.0
    %191 = vmatpush.msra.mxu0 0.0
    %192 = vmatpush.msra.mxu0 0.0
    %193 = vmatpush.msra.mxu0 0.0
    %194 = vmatpush.msra.mxu0 0.0
    %195 = vmatpush.msra.mxu0 %v184
    %196 = vmatpush.msra.mxu0 %v169
    %197 = vmatpush.msra.mxu0 %v168
    %198 = vmatpush.msra.mxu0 %v167
    %199 = vmatpush.msra.mxu0 %v166
    %200 = vmatpush.msra.mxu0 %v165
    %201 = vmatpush.msra.mxu0 %v164
    %202 = vmatmul.f32.gmra.mxu0 %v180
    %v203 = vpop.f32.mrf.mxu0
    %v204 = vadd.f32 %v176, %v203
    %205 = vdwg.mxu0
    %vm206 = vcmask 59392
    %207 = vst.msk [vmem:[#allocation2] sm:$0x7] %vm206, %v204
    // Predicated region
    $region22: #{tpu_custom_call.1} parent=1 // pred_check
      _
    $region23: #{tpu_custom_call.1} parent=1 // pred_check_branch
      %209 = sbr.rel (0) target = $region25
    $region24: #{tpu_custom_call.1} parent=1 // pred_region
      %211 = vsyncadd [#allocation3], 0
      %s213 = sshll.u32 [#allocation2], 4
      %s214 = int_to_ptr.vmem [resolvable:$true] %s213
      %s215 = sshll.u32 %s5, 4
      %s216 = int_to_ptr.hbm [resolvable:$true] %s215
      %218 = dma.vmem_to_hbm [thread:$0]  %s214, 64, %s216, [#allocation3]
    $region25: #{tpu_custom_call.1} parent=1 // pred_fallthru
      _
    // Predicated region
    $region26: #{tpu_custom_call.1} parent=1 // pred_check
      _
    $region27: #{tpu_custom_call.1} parent=1 // pred_check_branch
      %220 = sbr.rel (0) target = $region29
    $region28: #{tpu_custom_call.1} parent=1 // pred_region
      %222 = dma.done [#allocation3], 64
    $region29: #{tpu_custom_call.1} parent=1 // pred_fallthru
      _
    %223 = vsyncpa [#allocation3], 1

</llo_original>
